<compile_context>
chip_gen: v7x
topology: tpu7x:2x2x1
jax: 0.10.0
libtpu: 0.0.40
codegen_flags: <defaults>
</compile_context>

<pallas_src>
import jax
import jax.numpy as jnp
import numpy as np
from jax.experimental import pallas as pl
from jax.experimental.pallas import tpu as pltpu


def _round_up(x, m):
    return (x + m - 1) // m * m


def _mlp_softmax_kernel(x_ref, w1_ref, b1_ref, w2_ref, b2_ref, w3_ref, b3_ref,
                        out_ref):
    # x_ref: (tr, 128) — each 128-lane row packs 8 batch samples x 16 features.
    x = x_ref[...]

    # Layer 1: (tr,128) @ kron(I8,W1)=(128,64) + bias, ReLU
    h1 = jnp.dot(x, w1_ref[...], preferred_element_type=jnp.float32)
    h1 = jnp.maximum(h1 + b1_ref[...], 0.0)                           # (tr, 64)

    # Layer 2: (tr,64) @ kron(I8,W2)=(64,32) + bias, ReLU
    h2 = jnp.dot(h1.astype(w2_ref.dtype), w2_ref[...],
                 preferred_element_type=jnp.float32)
    h2 = jnp.maximum(h2 + b2_ref[...], 0.0)                           # (tr, 32)

    # Layer 3 with the softmax difference matrix D folded into the weights:
    # produces d = [l0-l1, l1-l0] per sample, interleaved along lanes.
    d = jnp.dot(h2.astype(w3_ref.dtype), w3_ref[...],
                preferred_element_type=jnp.float32) + b3_ref[...]     # (tr, 16)

    # 2-class softmax: softmax([l0,l1])[k] == sigmoid(lk - l_other).
    out_ref[...] = (1.0 / (1.0 + jnp.exp(-d))).astype(out_ref.dtype)


def mlp_softmax_pallas(x, w1, b1, w2, b2, w3, b3, *, block_b=65536):
    """Forward pass of ID_CIC_IDS2017_small_pforest.

    x : (B, 16)
    w1: (16, 8), b1: (1, 8)    (weights stored as (in, out) = torch W.T)
    w2: (8, 4),  b2: (1, 4)
    w3: (4, 2),  b3: (1, 2)
    returns (B, 2) softmax scores (float32).
    """
    B, F = x.shape
    assert F == 16
    dt = x.dtype

    # Pad the batch to a multiple of 8 only when needed (one copy); otherwise
    # the (B,16)->(B//8,128) reshape below is a free row-major relabel.
    B8 = _round_up(B, 8)
    if B8 != B:
        x = jnp.pad(x, ((0, B8 - B), (0, 0)))
    R = B8 // 8
    xr = x.reshape(R, 128)

    # Block-diagonal weights (lane-dense matmuls); D folds the 2-class softmax
    # into layer 3 so the kernel only needs a sigmoid.
    eye8 = jnp.eye(8, dtype=jnp.float32)
    D = jnp.array([[1.0, -1.0], [-1.0, 1.0]], jnp.float32)
    w1b = jnp.kron(eye8, w1.astype(jnp.float32)).astype(dt)              # (128, 64)
    w2b = jnp.kron(eye8, w2.astype(jnp.float32)).astype(dt)              # (64, 32)
    w3b = jnp.kron(eye8, w3.astype(jnp.float32) @ D).astype(dt)          # (32, 16)
    b1t = jnp.tile(b1.reshape(1, -1).astype(jnp.float32), (1, 8))        # (1, 64)
    b2t = jnp.tile(b2.reshape(1, -1).astype(jnp.float32), (1, 8))        # (1, 32)
    b3t = jnp.tile(b3.reshape(1, -1).astype(jnp.float32) @ D, (1, 8))    # (1, 16)

    # Batch tile in R-rows (1 R-row = 8 samples): large to amortize per-step
    # overhead, capped at ceil(R/2) so grid >= 2 (v7x megacore), multiple of 8.
    tr_cap = max(8, (block_b // 8) // 8 * 8)
    tr = min(tr_cap, max(8, _round_up(pl.cdiv(R, 2), 8)))
    tr = min(tr, _round_up(R, 8))
    grid = (pl.cdiv(R, tr),)

    def const_spec(shape):
        # Same block every grid step -> DMA'd once, VMEM-resident thereafter.
        return pl.BlockSpec(shape, lambda i: (0, 0))

    cost = pl.CostEstimate(
        flops=int(2 * R * (128 * 64 + 64 * 32 + 32 * 16)),
        transcendentals=int(16 * R),
        bytes_accessed=int(R * 128 * dt.itemsize + R * 16 * 4),
    )

    out = pl.pallas_call(
        _mlp_softmax_kernel,
        out_shape=jax.ShapeDtypeStruct((R, 16), jnp.float32),
        grid=grid,
        in_specs=[
            pl.BlockSpec((tr, 128), lambda i: (i, 0)),     # x tile, pipelined
            const_spec(w1b.shape), const_spec(b1t.shape),
            const_spec(w2b.shape), const_spec(b2t.shape),
            const_spec(w3b.shape), const_spec(b3t.shape),
        ],
        out_specs=pl.BlockSpec((tr, 16), lambda i: (i, 0)),
        compiler_params=pltpu.CompilerParams(
            dimension_semantics=("parallel",),
            vmem_limit_bytes=48 * 1024 * 1024),
        cost_estimate=cost,
    )(xr, w1b, b1t, w2b, b2t, w3b, b3t)

    # (R,16) -> (B8,2) is a free row-major reshape; drop padded rows.
    return out.reshape(B8, 2)[:B]


def init_params(key):
    """Deterministic init mimicking nn.Linear's uniform(-1/sqrt(fan_in), +)."""
    dims = [(16, 8), (8, 4), (4, 2)]
    params = []
    for i, (fan_in, fan_out) in enumerate(dims):
        kw, kb = jax.random.split(jax.random.fold_in(key, i))
        bound = 1.0 / np.sqrt(fan_in)
        # stored as (in, out) == torch weight (out, in) transposed
        w = jax.random.uniform(kw, (fan_in, fan_out), jnp.float32, -bound, bound)
        b = jax.random.uniform(kb, (1, fan_out), jnp.float32, -bound, bound)
        params.extend([w, b])
    return params


def reference_forward(x, w1, b1, w2, b2, w3, b3):
    h1 = jnp.maximum(x @ w1 + b1, 0.0)
    h2 = jnp.maximum(h1 @ w2 + b2, 0.0)
    logits = h2 @ w3 + b3
    return jax.nn.softmax(logits, axis=1)


if __name__ == "__main__":
    key = jax.random.PRNGKey(0)
    kx, kp = jax.random.split(key)
    w1, b1, w2, b2, w3, b3 = init_params(kp)

    # Small, non-multiple-of-8 batch: exercises the pad + ragged-tile path.
    B = 37
    x = jax.random.normal(kx, (B, 16), jnp.float32)
    out = jax.block_until_ready(mlp_softmax_pallas(x, w1, b1, w2, b2, w3, b3))
    ref = reference_forward(x, w1, b1, w2, b2, w3, b3)
    np.testing.assert_allclose(np.asarray(out), np.asarray(ref),
                               rtol=1e-5, atol=1e-5)
    np.testing.assert_allclose(np.asarray(out).sum(axis=1), np.ones(B),
                               rtol=1e-5, atol=1e-5)

    # Multi-tile grid path: a tiny block forces several pipelined steps with a
    # ragged tail tile and reuses the VMEM-resident weights across steps.
    B2 = 300
    x2 = jax.random.normal(jax.random.fold_in(kx, 1), (B2, 16), jnp.float32)
    out2 = jax.block_until_ready(
        mlp_softmax_pallas(x2, w1, b1, w2, b2, w3, b3, block_b=64))
    ref2 = reference_forward(x2, w1, b1, w2, b2, w3, b3)
    np.testing.assert_allclose(np.asarray(out2), np.asarray(ref2),
                               rtol=1e-5, atol=1e-5)

    print("KERNEL_OK")
</pallas_src>

<mosaic_0001>
module attributes {stable_mosaic.version = 11 : i64} {
  func.func @_mlp_softmax_kernel(%arg0: i32, %arg1: memref<8x128xf32, #tpu.memory_space<vmem>>, %arg2: memref<128x64xf32, #tpu.memory_space<vmem>>, %arg3: memref<1x64xf32, #tpu.memory_space<vmem>>, %arg4: memref<64x32xf32, #tpu.memory_space<vmem>>, %arg5: memref<1x32xf32, #tpu.memory_space<vmem>>, %arg6: memref<32x16xf32, #tpu.memory_space<vmem>>, %arg7: memref<1x16xf32, #tpu.memory_space<vmem>>, %arg8: memref<8x16xf32, #tpu.memory_space<vmem>>) attributes {dimension_semantics = [#tpu.dimension_semantics<parallel>], iteration_bounds = array<i64: 1>, scalar_prefetch = 0 : i64, scratch_operands = 0 : i64, tpu.core_type = #tpu.core_type<tc>, window_params = [{transform_indices = @transform_0, window_bounds = array<i64: 8, 128>}, {pipeline_mode = #tpu.pipeline_mode<synchronous>, transform_indices = @transform_1, window_bounds = array<i64: 128, 64>}, {pipeline_mode = #tpu.pipeline_mode<synchronous>, transform_indices = @transform_2, window_bounds = array<i64: 1, 64>}, {pipeline_mode = #tpu.pipeline_mode<synchronous>, transform_indices = @transform_3, window_bounds = array<i64: 64, 32>}, {pipeline_mode = #tpu.pipeline_mode<synchronous>, transform_indices = @transform_4, window_bounds = array<i64: 1, 32>}, {pipeline_mode = #tpu.pipeline_mode<synchronous>, transform_indices = @transform_5, window_bounds = array<i64: 32, 16>}, {pipeline_mode = #tpu.pipeline_mode<synchronous>, transform_indices = @transform_6, window_bounds = array<i64: 1, 16>}, {transform_indices = @transform_7, window_bounds = array<i64: 8, 16>}]} {
    %c0 = arith.constant 0 : index
    %c0_0 = arith.constant 0 : index
    %0 = vector.load %arg1[%c0, %c0_0] : memref<8x128xf32, #tpu.memory_space<vmem>>, vector<8x128xf32>
    %c0_1 = arith.constant 0 : index
    %c0_2 = arith.constant 0 : index
    %1 = vector.load %arg2[%c0_1, %c0_2] : memref<128x64xf32, #tpu.memory_space<vmem>>, vector<128x64xf32>
    %cst = arith.constant dense<0.000000e+00> : vector<8x64xf32>
    %2 = tpu.matmul %0, %1, %cst {dimension_numbers = #tpu.dot_dimension_numbers<[1], [0], [0], [1], [0, 0, 1, 1], [], []>} : vector<8x128xf32>, vector<128x64xf32>, vector<8x64xf32> -> vector<8x64xf32>
    %c0_3 = arith.constant 0 : index
    %c0_4 = arith.constant 0 : index
    %3 = vector.load %arg3[%c0_3, %c0_4] : memref<1x64xf32, #tpu.memory_space<vmem>>, vector<1x64xf32>
    %4 = vector.broadcast %3 : vector<1x64xf32> to vector<8x64xf32>
    %5 = arith.addf %2, %4 : vector<8x64xf32>
    %cst_5 = arith.constant 0.000000e+00 : f32
    %6 = vector.broadcast %cst_5 : f32 to vector<8x64xf32>
    %7 = arith.maximumf %5, %6 : vector<8x64xf32>
    %c0_6 = arith.constant 0 : index
    %c0_7 = arith.constant 0 : index
    %8 = vector.load %arg4[%c0_6, %c0_7] : memref<64x32xf32, #tpu.memory_space<vmem>>, vector<64x32xf32>
    %cst_8 = arith.constant dense<0.000000e+00> : vector<8x32xf32>
    %9 = tpu.matmul %7, %8, %cst_8 {dimension_numbers = #tpu.dot_dimension_numbers<[1], [0], [0], [1], [0, 0, 1, 1], [], []>} : vector<8x64xf32>, vector<64x32xf32>, vector<8x32xf32> -> vector<8x32xf32>
    %c0_9 = arith.constant 0 : index
    %c0_10 = arith.constant 0 : index
    %10 = vector.load %arg5[%c0_9, %c0_10] : memref<1x32xf32, #tpu.memory_space<vmem>>, vector<1x32xf32>
    %11 = vector.broadcast %10 : vector<1x32xf32> to vector<8x32xf32>
    %12 = arith.addf %9, %11 : vector<8x32xf32>
    %cst_11 = arith.constant 0.000000e+00 : f32
    %13 = vector.broadcast %cst_11 : f32 to vector<8x32xf32>
    %14 = arith.maximumf %12, %13 : vector<8x32xf32>
    %c0_12 = arith.constant 0 : index
    %c0_13 = arith.constant 0 : index
    %15 = vector.load %arg6[%c0_12, %c0_13] : memref<32x16xf32, #tpu.memory_space<vmem>>, vector<32x16xf32>
    %cst_14 = arith.constant dense<0.000000e+00> : vector<8x16xf32>
    %16 = tpu.matmul %14, %15, %cst_14 {dimension_numbers = #tpu.dot_dimension_numbers<[1], [0], [0], [1], [0, 0, 1, 1], [], []>} : vector<8x32xf32>, vector<32x16xf32>, vector<8x16xf32> -> vector<8x16xf32>
    %c0_15 = arith.constant 0 : index
    %c0_16 = arith.constant 0 : index
    %17 = vector.load %arg7[%c0_15, %c0_16] : memref<1x16xf32, #tpu.memory_space<vmem>>, vector<1x16xf32>
    %18 = vector.broadcast %17 : vector<1x16xf32> to vector<8x16xf32>
    %19 = arith.addf %16, %18 : vector<8x16xf32>
    %cst_17 = arith.constant 0.000000e+00 : f32
    %20 = vector.broadcast %cst_17 : f32 to vector<8x16xf32>
    %21 = arith.subf %20, %19 : vector<8x16xf32>
    %22 = math.exp %21 : vector<8x16xf32>
    %cst_18 = arith.constant 1.000000e+00 : f32
    %23 = vector.broadcast %cst_18 : f32 to vector<8x16xf32>
    %24 = arith.addf %23, %22 : vector<8x16xf32>
    %cst_19 = arith.constant 1.000000e+00 : f32
    %25 = vector.broadcast %cst_19 : f32 to vector<8x16xf32>
    %26 = arith.divf %25, %24 : vector<8x16xf32>
    %c0_20 = arith.constant 0 : index
    %c0_21 = arith.constant 0 : index
    %27 = vector.load %arg8[%c0_20, %c0_21] : memref<8x16xf32, #tpu.memory_space<vmem>>, vector<8x16xf32>
    tpu.vector_store %arg8[%c0_20, %c0_21], %26 {strides = array<i32>} : memref<8x16xf32, #tpu.memory_space<vmem>>, vector<8x16xf32>,
    return
  }
  func.func @transform_0(%arg0: i32) -> (i32, i32) {
    %c0_i32 = arith.constant 0 : i32
    %c0_i32_0 = arith.constant 0 : i32
    return %arg0, %c0_i32 : i32, i32
  }
  func.func @transform_1(%arg0: i32) -> (i32, i32) {
    %c0_i32 = arith.constant 0 : i32
    %c0_i32_0 = arith.constant 0 : i32
    %c0_i32_1 = arith.constant 0 : i32
    return %c0_i32, %c0_i32_0 : i32, i32
  }
  func.func @transform_2(%arg0: i32) -> (i32, i32) {
    %c0_i32 = arith.constant 0 : i32
    %c0_i32_0 = arith.constant 0 : i32
    %c0_i32_1 = arith.constant 0 : i32
    return %c0_i32, %c0_i32_0 : i32, i32
  }
  func.func @transform_3(%arg0: i32) -> (i32, i32) {
    %c0_i32 = arith.constant 0 : i32
    %c0_i32_0 = arith.constant 0 : i32
    %c0_i32_1 = arith.constant 0 : i32
    return %c0_i32, %c0_i32_0 : i32, i32
  }
  func.func @transform_4(%arg0: i32) -> (i32, i32) {
    %c0_i32 = arith.constant 0 : i32
    %c0_i32_0 = arith.constant 0 : i32
    %c0_i32_1 = arith.constant 0 : i32
    return %c0_i32, %c0_i32_0 : i32, i32
  }
  func.func @transform_5(%arg0: i32) -> (i32, i32) {
    %c0_i32 = arith.constant 0 : i32
    %c0_i32_0 = arith.constant 0 : i32
    %c0_i32_1 = arith.constant 0 : i32
    return %c0_i32, %c0_i32_0 : i32, i32
  }
  func.func @transform_6(%arg0: i32) -> (i32, i32) {
    %c0_i32 = arith.constant 0 : i32
    %c0_i32_0 = arith.constant 0 : i32
    %c0_i32_1 = arith.constant 0 : i32
    return %c0_i32, %c0_i32_0 : i32, i32
  }
  func.func @transform_7(%arg0: i32) -> (i32, i32) {
    %c0_i32 = arith.constant 0 : i32
    %c0_i32_0 = arith.constant 0 : i32
    return %arg0, %c0_i32 : i32, i32
  }
}

</mosaic_0001>

<llo_original>
// kernel: tpu_custom_call.1
$region0: #{tpu_custom_call.1}
  #allocation0 [shape = 'u32[]', space=smem, size = 0x4, offset = 0x4, fixed_abs, tag = 'smem constant byte address 0x4 - core index']
  #allocation1 [shape = 'u32[144,128]{1,0:T(1,128)}', space=vmem, size = 0x12000, scoped, tag = 'internal scratch']
  %s0 = inlined_call_operand.vmem [shape: f32[5,128], index: 0, kind: input, shape index: {}]
  %s1 = inlined_call_operand.vmem [shape: f32[128,64], index: 1, kind: input, shape index: {}]
  %s2 = inlined_call_operand.vmem [shape: f32[1,64], index: 2, kind: input, shape index: {}]
  %s3 = inlined_call_operand.vmem [shape: f32[64,32], index: 3, kind: input, shape index: {}]
  %s4 = inlined_call_operand.vmem [shape: f32[1,32], index: 4, kind: input, shape index: {}]
  %s5 = inlined_call_operand.vmem [shape: f32[32,16], index: 5, kind: input, shape index: {}]
  %s6 = inlined_call_operand.vmem [shape: f32[1,16], index: 6, kind: input, shape index: {}]
  %s7 = inlined_call_operand.hbm [shape: f32[5,16], index: 7, kind: output, shape index: {}]
  %s8 = sld [smem:[#allocation0]]
  $region38: #{tpu_custom_call.1} parent=0
    _
  %s10 = ssub.s32 1, %s8
  %s11 = scalar_select 0, %s10, %s8
  $region1: #{tpu_custom_call.1} parent=0
    #allocation2 [shape = 'u8[4096]{0}', space=vmem, size = 0x1000, scoped, tag = 'output window, operand 0, single buffered']
    #allocation3 [shape = 's32[1]{0}', space=sflag, size = 0x4, scoped, tag = 'scoped memory for tpu_custom_call.1']
    %12 = vsyncpa [#allocation3], 0
    // Predicated region
    $region2: #{tpu_custom_call.1} parent=1 // pred_check
      _
    $region3: #{tpu_custom_call.1} parent=1 // pred_check_branch
      %14 = sbr.rel (0) target = $region5
    $region4: #{tpu_custom_call.1} parent=1 // pred_region
      _
    $region5: #{tpu_custom_call.1} parent=1 // pred_fallthru
      _
    // Predicated region
    $region6: #{tpu_custom_call.1} parent=1 // pred_check
      _
    $region7: #{tpu_custom_call.1} parent=1 // pred_check_branch
      %16 = sbr.rel (0) target = $region9
    $region8: #{tpu_custom_call.1} parent=1 // pred_region
      _
    $region9: #{tpu_custom_call.1} parent=1 // pred_fallthru
      _
    // Predicated region
    $region10: #{tpu_custom_call.1} parent=1 // pred_check
      _
    $region11: #{tpu_custom_call.1} parent=1 // pred_check_branch
      %18 = sbr.rel (0) target = $region13
    $region12: #{tpu_custom_call.1} parent=1 // pred_region
      _
    $region13: #{tpu_custom_call.1} parent=1 // pred_fallthru
      _
    // Predicated region
    $region14: #{tpu_custom_call.1} parent=1 // pred_check
      _
    $region15: #{tpu_custom_call.1} parent=1 // pred_check_branch
      %20 = sbr.rel (0) target = $region17
    $region16: #{tpu_custom_call.1} parent=1 // pred_region
      _
    $region17: #{tpu_custom_call.1} parent=1 // pred_fallthru
      _
    // Predicated region
    $region18: #{tpu_custom_call.1} parent=1 // pred_check
      _
    $region19: #{tpu_custom_call.1} parent=1 // pred_check_branch
      %22 = sbr.rel (0) target = $region21
    $region20: #{tpu_custom_call.1} parent=1 // pred_region
      _
    $region21: #{tpu_custom_call.1} parent=1 // pred_fallthru
      _
    // Predicated region
    $region22: #{tpu_custom_call.1} parent=1 // pred_check
      _
    $region23: #{tpu_custom_call.1} parent=1 // pred_check_branch
      %24 = sbr.rel (0) target = $region25
    $region24: #{tpu_custom_call.1} parent=1 // pred_region
      _
    $region25: #{tpu_custom_call.1} parent=1 // pred_fallthru
      _
    // Predicated region
    $region26: #{tpu_custom_call.1} parent=1 // pred_check
      _
    $region27: #{tpu_custom_call.1} parent=1 // pred_check_branch
      %26 = sbr.rel (0) target = $region29
    $region28: #{tpu_custom_call.1} parent=1 // pred_region
      _
    $region29: #{tpu_custom_call.1} parent=1 // pred_fallthru
      _
    %v27 = vld [vmem:[%s0] sm:$0xff]
    %v28 = vld [vmem:[%s1] sm:$0xff]
    %v29 = vld [vmem:[%s1 + $0x8] sm:$0xff]
    %v30 = vld [vmem:[%s1 + $0x10] sm:$0xff]
    %v31 = vld [vmem:[%s1 + $0x18] sm:$0xff]
    %v32 = vld [vmem:[%s1 + $0x20] sm:$0xff]
    %v33 = vld [vmem:[%s1 + $0x28] sm:$0xff]
    %v34 = vld [vmem:[%s1 + $0x30] sm:$0xff]
    %v35 = vld [vmem:[%s1 + $0x38] sm:$0xff]
    %v36 = vld [vmem:[%s1 + $0x40] sm:$0xff]
    %v37 = vld [vmem:[%s1 + $0x48] sm:$0xff]
    %v38 = vld [vmem:[%s1 + $0x50] sm:$0xff]
    %v39 = vld [vmem:[%s1 + $0x58] sm:$0xff]
    %v40 = vld [vmem:[%s1 + $0x60] sm:$0xff]
    %v41 = vld [vmem:[%s1 + $0x68] sm:$0xff]
    %v42 = vld [vmem:[%s1 + $0x70] sm:$0xff]
    %v43 = vld [vmem:[%s1 + $0x78] sm:$0xff]
    %v44 = vld [vmem:[%s2] sm:$0x1]
    %v46 = vlaneseq
    %v47 = vshrl.u32 %v46, 7
    %v48 = vsub.s32 0, %v47
    %v49 = vrot.slane %v44, %v48
    %51 = vmatprep.subr.mxu0 0.0
    %52 = vmatpush1.msra.mxu0 %v28
    %53 = vmatprep.subr.mxu0 0.0
    %54 = vmatpush1.msra.mxu0 %v29
    %55 = vmatprep.subr.mxu0 0.0
    %56 = vmatpush1.msra.mxu0 %v30
    %57 = vmatprep.subr.mxu0 0.0
    %58 = vmatpush1.msra.mxu0 %v31
    %59 = vmatprep.subr.mxu0 0.0
    %60 = vmatpush1.msra.mxu0 %v32
    %61 = vmatprep.subr.mxu0 0.0
    %62 = vmatpush1.msra.mxu0 %v33
    %63 = vmatprep.subr.mxu0 0.0
    %64 = vmatpush1.msra.mxu0 %v34
    %65 = vmatprep.subr.mxu0 0.0
    %66 = vmatpush1.msra.mxu0 %v35
    %67 = vmatprep.subr.mxu0 0.0
    %68 = vmatpush1.msra.mxu0 %v36
    %69 = vmatprep.subr.mxu0 0.0
    %70 = vmatpush1.msra.mxu0 %v37
    %71 = vmatprep.subr.mxu0 0.0
    %72 = vmatpush1.msra.mxu0 %v38
    %73 = vmatprep.subr.mxu0 0.0
    %74 = vmatpush1.msra.mxu0 %v39
    %75 = vmatprep.subr.mxu0 0.0
    %76 = vmatpush1.msra.mxu0 %v40
    %77 = vmatprep.subr.mxu0 0.0
    %78 = vmatpush1.msra.mxu0 %v41
    %79 = vmatprep.subr.mxu0 0.0
    %80 = vmatpush1.msra.mxu0 %v42
    %81 = vmatprep.subr.mxu0 0.0
    %82 = vmatpush1.msra.mxu0 %v43
    %83 = vmatprep.subr.mxu0 0.0
    %84 = vmatpush1.msra.mxu0 0.0
    %85 = vmatprep.subr.mxu0 0.0
    %86 = vmatpush1.msra.mxu0 0.0
    %87 = vmatprep.subr.mxu0 0.0
    %88 = vmatpush1.msra.mxu0 0.0
    %89 = vmatprep.subr.mxu0 0.0
    %90 = vmatpush1.msra.mxu0 0.0
    %91 = vmatprep.subr.mxu0 0.0
    %92 = vmatpush1.msra.mxu0 0.0
    %93 = vmatprep.subr.mxu0 0.0
    %94 = vmatpush1.msra.mxu0 0.0
    %95 = vmatprep.subr.mxu0 0.0
    %96 = vmatpush1.msra.mxu0 0.0
    %97 = vmatprep.subr.mxu0 0.0
    %98 = vmatpush1.msra.mxu0 0.0
    %99 = vmatprep.subr.mxu0 0.0
    %100 = vmatpush1.msra.mxu0 0.0
    %101 = vmatprep.subr.mxu0 0.0
    %102 = vmatpush1.msra.mxu0 0.0
    %103 = vmatprep.subr.mxu0 0.0
    %104 = vmatpush1.msra.mxu0 0.0
    %105 = vmatprep.subr.mxu0 0.0
    %106 = vmatpush1.msra.mxu0 0.0
    %107 = vmatprep.subr.mxu0 0.0
    %108 = vmatpush1.msra.mxu0 0.0
    %109 = vmatprep.subr.mxu0 0.0
    %110 = vmatpush1.msra.mxu0 0.0
    %111 = vmatprep.subr.mxu0 0.0
    %112 = vmatpush1.msra.mxu0 0.0
    %113 = vmatprep.subr.mxu0 0.0
    %114 = vmatpush1.msra.mxu0 0.0
    %115 = vmatprep.mubr.f32.mxu0 0.0
    %116 = vmatmul.mubr.f32.gmra.mrb[0].mxu0 %v27
    %v117 = vpop.f32.mrb[0].mxu0
    %v118 = vadd.f32 %v49, %v117
    %v119 = vpop.f32.mrb[0].mxu0
    %120 = vdwg.mxu0
    %v121 = vmax.f32 %v118, 0.0
    %v122 = vld [vmem:[%s3] sm:$0xff]
    %v123 = vld [vmem:[%s3 + $0x8] sm:$0xff]
    %v124 = vld [vmem:[%s3 + $0x10] sm:$0xff]
    %v125 = vld [vmem:[%s3 + $0x18] sm:$0xff]
    %v126 = vld [vmem:[%s3 + $0x20] sm:$0xff]
    %v127 = vld [vmem:[%s3 + $0x28] sm:$0xff]
    %v128 = vld [vmem:[%s3 + $0x30] sm:$0xff]
    %v129 = vld [vmem:[%s3 + $0x38] sm:$0xff]
    %v130 = vld [vmem:[%s4] sm:$0x1]
    %v132 = vlaneseq
    %v133 = vshrl.u32 %v132, 7
    %v134 = vsub.s32 0, %v133
    %v135 = vrot.slane %v130, %v134
    %vm137 = vcmask 523264
    %v139 = vsel %vm137, %v121, 0
    %141 = vmatprep.subr.mxu0 0.0
    %142 = vmatpush1.msra.mxu0 %v122
    %143 = vmatprep.subr.mxu0 0.0
    %144 = vmatpush1.msra.mxu0 %v123
    %145 = vmatprep.subr.mxu0 0.0
    %146 = vmatpush1.msra.mxu0 %v124
    %147 = vmatprep.subr.mxu0 0.0
    %148 = vmatpush1.msra.mxu0 %v125
    %149 = vmatprep.subr.mxu0 0.0
    %150 = vmatpush1.msra.mxu0 %v126
    %151 = vmatprep.subr.mxu0 0.0
    %152 = vmatpush1.msra.mxu0 %v127
    %153 = vmatprep.subr.mxu0 0.0
    %154 = vmatpush1.msra.mxu0 %v128
    %155 = vmatprep.subr.mxu0 0.0
    %156 = vmatpush1.msra.mxu0 %v129
    %157 = vmatprep.subr.mxu0 0.0
    %158 = vmatpush1.msra.mxu0 0.0
    %159 = vmatprep.subr.mxu0 0.0
    %160 = vmatpush1.msra.mxu0 0.0
    %161 = vmatprep.subr.mxu0 0.0
    %162 = vmatpush1.msra.mxu0 0.0
    %163 = vmatprep.subr.mxu0 0.0
    %164 = vmatpush1.msra.mxu0 0.0
    %165 = vmatprep.subr.mxu0 0.0
    %166 = vmatpush1.msra.mxu0 0.0
    %167 = vmatprep.subr.mxu0 0.0
    %168 = vmatpush1.msra.mxu0 0.0
    %169 = vmatprep.subr.mxu0 0.0
    %170 = vmatpush1.msra.mxu0 0.0
    %171 = vmatprep.subr.mxu0 0.0
    %172 = vmatpush1.msra.mxu0 0.0
    %173 = vmatprep.subr.mxu0 0.0
    %174 = vmatpush1.msra.mxu0 0.0
    %175 = vmatprep.subr.mxu0 0.0
    %176 = vmatpush1.msra.mxu0 0.0
    %177 = vmatprep.subr.mxu0 0.0
    %178 = vmatpush1.msra.mxu0 0.0
    %179 = vmatprep.subr.mxu0 0.0
    %180 = vmatpush1.msra.mxu0 0.0
    %181 = vmatprep.subr.mxu0 0.0
    %182 = vmatpush1.msra.mxu0 0.0
    %183 = vmatprep.subr.mxu0 0.0
    %184 = vmatpush1.msra.mxu0 0.0
    %185 = vmatprep.subr.mxu0 0.0
    %186 = vmatpush1.msra.mxu0 0.0
    %187 = vmatprep.subr.mxu0 0.0
    %188 = vmatpush1.msra.mxu0 0.0
    %189 = vmatprep.subr.mxu0 0.0
    %190 = vmatpush1.msra.mxu0 0.0
    %191 = vmatprep.subr.mxu0 0.0
    %192 = vmatpush1.msra.mxu0 0.0
    %193 = vmatprep.subr.mxu0 0.0
    %194 = vmatpush1.msra.mxu0 0.0
    %195 = vmatprep.subr.mxu0 0.0
    %196 = vmatpush1.msra.mxu0 0.0
    %197 = vmatprep.subr.mxu0 0.0
    %198 = vmatpush1.msra.mxu0 0.0
    %199 = vmatprep.subr.mxu0 0.0
    %200 = vmatpush1.msra.mxu0 0.0
    %201 = vmatprep.subr.mxu0 0.0
    %202 = vmatpush1.msra.mxu0 0.0
    %203 = vmatprep.subr.mxu0 0.0
    %204 = vmatpush1.msra.mxu0 0.0
    %205 = vmatprep.mubr.f32.mxu0 0.0
    %206 = vmatmul.mubr.f32.gmra.mrb[0].mxu0 %v139
    %v207 = vpop.f32.mrb[0].mxu0
    %v208 = vadd.f32 %v135, %v207
    %v209 = vpop.f32.mrb[0].mxu0
    %210 = vdwg.mxu0
    %v211 = vmax.f32 %v208, 0.0
    %v212 = vld [vmem:[%s5] sm:$0xff]
    %v213 = vld [vmem:[%s5 + $0x8] sm:$0xff]
    %v214 = vld [vmem:[%s5 + $0x10] sm:$0xff]
    %v215 = vld [vmem:[%s5 + $0x18] sm:$0xff]
    %v216 = vld [vmem:[%s6] sm:$0x1]
    %v218 = vlaneseq
    %v219 = vshrl.u32 %v218, 7
    %v220 = vsub.s32 0, %v219
    %v221 = vrot.slane %v216, %v220
    %vm223 = vcmask 261120
    %v225 = vsel %vm223, %v211, 0
    %227 = vmatprep.subr.mxu0 0.0
    %228 = vmatpush1.msra.mxu0 %v212
    %229 = vmatprep.subr.mxu0 0.0
    %230 = vmatpush1.msra.mxu0 %v213
    %231 = vmatprep.subr.mxu0 0.0
    %232 = vmatpush1.msra.mxu0 %v214
    %233 = vmatprep.subr.mxu0 0.0
    %234 = vmatpush1.msra.mxu0 %v215
    %235 = vmatprep.subr.mxu0 0.0
    %236 = vmatpush1.msra.mxu0 0.0
    %237 = vmatprep.subr.mxu0 0.0
    %238 = vmatpush1.msra.mxu0 0.0
    %239 = vmatprep.subr.mxu0 0.0
    %240 = vmatpush1.msra.mxu0 0.0
    %241 = vmatprep.subr.mxu0 0.0
    %242 = vmatpush1.msra.mxu0 0.0
    %243 = vmatprep.subr.mxu0 0.0
    %244 = vmatpush1.msra.mxu0 0.0
    %245 = vmatprep.subr.mxu0 0.0
    %246 = vmatpush1.msra.mxu0 0.0
    %247 = vmatprep.subr.mxu0 0.0
    %248 = vmatpush1.msra.mxu0 0.0
    %249 = vmatprep.subr.mxu0 0.0
    %250 = vmatpush1.msra.mxu0 0.0
    %251 = vmatprep.subr.mxu0 0.0
    %252 = vmatpush1.msra.mxu0 0.0
    %253 = vmatprep.subr.mxu0 0.0
    %254 = vmatpush1.msra.mxu0 0.0
    %255 = vmatprep.subr.mxu0 0.0
    %256 = vmatpush1.msra.mxu0 0.0
    %257 = vmatprep.subr.mxu0 0.0
    %258 = vmatpush1.msra.mxu0 0.0
    %259 = vmatprep.subr.mxu0 0.0
    %260 = vmatpush1.msra.mxu0 0.0
    %261 = vmatprep.subr.mxu0 0.0
    %262 = vmatpush1.msra.mxu0 0.0
    %263 = vmatprep.subr.mxu0 0.0
    %264 = vmatpush1.msra.mxu0 0.0
    %265 = vmatprep.subr.mxu0 0.0
    %266 = vmatpush1.msra.mxu0 0.0
    %267 = vmatprep.subr.mxu0 0.0
    %268 = vmatpush1.msra.mxu0 0.0
    %269 = vmatprep.subr.mxu0 0.0
    %270 = vmatpush1.msra.mxu0 0.0
    %271 = vmatprep.subr.mxu0 0.0
    %272 = vmatpush1.msra.mxu0 0.0
    %273 = vmatprep.subr.mxu0 0.0
    %274 = vmatpush1.msra.mxu0 0.0
    %275 = vmatprep.subr.mxu0 0.0
    %276 = vmatpush1.msra.mxu0 0.0
    %277 = vmatprep.subr.mxu0 0.0
    %278 = vmatpush1.msra.mxu0 0.0
    %279 = vmatprep.subr.mxu0 0.0
    %280 = vmatpush1.msra.mxu0 0.0
    %281 = vmatprep.subr.mxu0 0.0
    %282 = vmatpush1.msra.mxu0 0.0
    %283 = vmatprep.subr.mxu0 0.0
    %284 = vmatpush1.msra.mxu0 0.0
    %285 = vmatprep.subr.mxu0 0.0
    %286 = vmatpush1.msra.mxu0 0.0
    %287 = vmatprep.subr.mxu0 0.0
    %288 = vmatpush1.msra.mxu0 0.0
    %289 = vmatprep.subr.mxu0 0.0
    %290 = vmatpush1.msra.mxu0 0.0
    %291 = vmatprep.mubr.f32.mxu0 0.0
    %292 = vmatmul.mubr.f32.gmra.mrb[0].mxu0 %v225
    %v293 = vpop.f32.mrb[0].mxu0
    %v294 = vadd.f32 %v221, %v293
    %v295 = vpop.f32.mrb[0].mxu0
    %296 = vdwg.mxu0
    %v297 = vsub.f32 0.0, %v294
    %v298 = vmul.f32 %v297, 1.442695
    %v299 = vpow.pop %v298
    %v300 = vadd.f32 %v299, 1.0
    %v301 = vrcp.pop %v300
    %v302 = vmul.f32 1.0, %v301
    %vm303 = vcmask 130048
    %304 = vst.msk [vmem:[#allocation2] sm:$0xff] %vm303, %v302
    // Predicated region
    $region30: #{tpu_custom_call.1} parent=1 // pred_check
      _
    $region31: #{tpu_custom_call.1} parent=1 // pred_check_branch
      %306 = sbr.rel (0) target = $region33
    $region32: #{tpu_custom_call.1} parent=1 // pred_region
      %s308 = ssub.s32 128, 128
      %309 = vsyncadd [#allocation3], %s308
      %s311 = sshll.u32 [#allocation2], 4
      %s312 = int_to_ptr.vmem [resolvable:$true] %s311
      %314 = dma.vmem_to_hbm [thread:$0]  %s312, 128, %s7, [#allocation3]
    $region33: #{tpu_custom_call.1} parent=1 // pred_fallthru
      _
    // Predicated region
    $region34: #{tpu_custom_call.1} parent=1 // pred_check
      _
    $region35: #{tpu_custom_call.1} parent=1 // pred_check_branch
      %316 = sbr.rel (0) target = $region37
    $region36: #{tpu_custom_call.1} parent=1 // pred_region
      %317 = dma.done [#allocation3], 128
    $region37: #{tpu_custom_call.1} parent=1 // pred_fallthru
      _
    %318 = vsyncpa [#allocation3], 1

</llo_original>
